<compile_context>
chip_gen: v6e
topology: v6e:2x2x1
jax: 0.10.0
libtpu: 0.0.40
codegen_flags: <defaults>
</compile_context>

<pallas_src>
import functools

import jax
import jax.numpy as jnp
from jax.experimental import pallas as pl
from jax.experimental.pallas import tpu as pltpu


def _round_up(n, m):
    return ((n + m - 1) // m) * m


def _cdiv(a, b):
    return (a + b - 1) // b


# ---------------------------------------------------------------------------
# Kernels
# ---------------------------------------------------------------------------
def fcnet_resident_kernel(x_ref, w1_ref, b1_ref, w2_ref, b2_ref, o_ref):
    """Both weight matrices VMEM-resident; one batch tile per grid step."""
    x = x_ref[...].astype(w1_ref.dtype)                 # f32 -> bf16 on the VPU
    h = jnp.dot(x, w1_ref[...], preferred_element_type=jnp.float32)
    h = jnp.maximum(h + b1_ref[...], 0.0)               # bias + ReLU in f32
    y = jnp.dot(h.astype(w2_ref.dtype), w2_ref[...],
                preferred_element_type=jnp.float32)
    o_ref[...] = (y + b2_ref[...]).astype(o_ref.dtype)  # lane-dense store


def fcnet_dh_tiled_kernel(x_ref, w1_ref, b1_ref, w2_ref, b2_ref, o_ref, acc_ref):
    """Hidden dim tiled (last, 'arbitrary' grid axis) with f32 accumulator.

    ReLU per hidden slice is exact (bias+ReLU are elementwise over hidden
    columns); the second matmul is accumulated over hidden tiles.
    """
    j = pl.program_id(1)

    @pl.when(j == 0)
    def _():
        acc_ref[...] = jnp.zeros_like(acc_ref)

    x = x_ref[...].astype(w1_ref.dtype)
    h = jnp.dot(x, w1_ref[...], preferred_element_type=jnp.float32)
    h = jnp.maximum(h + b1_ref[...], 0.0)
    acc_ref[...] += jnp.dot(h.astype(w2_ref.dtype), w2_ref[...],
                            preferred_element_type=jnp.float32)

    @pl.when(j == pl.num_programs(1) - 1)
    def _():
        o_ref[...] = (acc_ref[...] + b2_ref[...]).astype(o_ref.dtype)


# ---------------------------------------------------------------------------
# Hardware-aware sizing
# ---------------------------------------------------------------------------
def _tpu_budget():
    """Returns (vmem_limit_bytes, default_batch_tile) for the local TPU."""
    kind = ""
    try:
        kind = jax.devices()[0].device_kind.lower()
    except Exception:
        pass
    cap = 0
    try:
        cap = int(pltpu.get_tpu_info().vmem_capacity_bytes)
    except Exception:
        cap = 0
    if cap <= 0:
        if "v7" in kind:
            cap = 64 << 20
        elif "v5" in kind or "v6" in kind:
            cap = 128 << 20
        else:
            cap = 64 << 20                      # conservative default
    vmem_limit = int(0.8 * cap)                 # ~20% headroom for compiler scratch
    # v6e/v7x MXUs are 256 wide -> 256-row M tiles; v5e (128-wide) keeps 128.
    batch_tile = 256 if ("v6" in kind or "v7" in kind) else 128
    return vmem_limit, batch_tile


def _resident_vmem_bytes(tb, d_in, d_h_p, d_out_p, out_bytes):
    return (2 * tb * d_in * 4                    # x tiles (f32, double-buffered)
            + tb * d_in * 2                      # in-kernel bf16 copy of x tile
            + 2 * d_in * d_h_p * 2               # W1 (bf16, 2 pipeline buffers)
            + 2 * d_h_p * d_out_p * 2            # W2 (bf16, 2 pipeline buffers)
            + 2 * (d_h_p + d_out_p) * 4          # biases (f32)
            + 2 * tb * d_out_p * out_bytes       # out tiles
            + tb * d_h_p * (4 + 2))              # hidden temp: f32 + bf16 copy


def _dh_tiled_vmem_bytes(tb, d_in, tdh, d_out_p, out_bytes):
    return (2 * tb * d_in * 4
            + tb * d_in * 2
            + 2 * d_in * tdh * 2                 # W1 slice
            + 2 * tdh * d_out_p * 2              # W2 slice
            + 2 * (tdh + d_out_p) * 4
            + 2 * tb * d_out_p * out_bytes
            + tb * d_out_p * 4                   # f32 accumulator scratch
            + tb * tdh * (4 + 2))                # hidden slice temp: f32 + bf16


# ---------------------------------------------------------------------------
# Parameters
# ---------------------------------------------------------------------------
def init_params(key, d_in, d_hidden, d_out, dtype=jnp.float32):
    """Deterministic nn.Linear-style init: U(-1/sqrt(fan_in), 1/sqrt(fan_in))."""
    k1, k2, k3, k4 = jax.random.split(key, 4)
    lim1 = 1.0 / jnp.sqrt(jnp.asarray(d_in, dtype))
    lim2 = 1.0 / jnp.sqrt(jnp.asarray(d_hidden, dtype))
    w1 = jax.random.uniform(k1, (d_in, d_hidden), dtype, -lim1, lim1)
    b1 = jax.random.uniform(k2, (1, d_hidden), dtype, -lim1, lim1)
    w2 = jax.random.uniform(k3, (d_hidden, d_out), dtype, -lim2, lim2)
    b2 = jax.random.uniform(k4, (1, d_out), dtype, -lim2, lim2)
    return w1, b1, w2, b2


def prep_params(w1, b1, w2, b2, mm_dtype=jnp.bfloat16):
    """One-time padding/cast of parameters (hoisted out of the forward path).

    Hidden / output dims are padded to multiples of 128 (lane-dense MXU
    operands, unmasked output stores); zero padding is exact through
    matmul + bias + ReLU. The input feature dim keeps its natural width.
    """
    d_in, d_h = w1.shape
    d_out = w2.shape[1]
    d_h_p = _round_up(d_h, 128)
    d_out_p = _round_up(d_out, 128)
    w1_p = jnp.zeros((d_in, d_h_p), mm_dtype).at[:, :d_h].set(w1.astype(mm_dtype))
    w2_p = jnp.zeros((d_h_p, d_out_p), mm_dtype).at[:d_h, :d_out].set(w2.astype(mm_dtype))
    b1_p = jnp.zeros((1, d_h_p), jnp.float32).at[:, :d_h].set(
        b1.reshape(1, -1).astype(jnp.float32))
    b2_p = jnp.zeros((1, d_out_p), jnp.float32).at[:, :d_out].set(
        b2.reshape(1, -1).astype(jnp.float32))
    return (w1_p, b1_p, w2_p, b2_p), d_out


# ---------------------------------------------------------------------------
# Forward
# ---------------------------------------------------------------------------
@functools.partial(jax.jit, static_argnames=("d_out", "batch_tile", "d_h_tile"))
def fcnet_forward(x, w1_p, b1_p, w2_p, b2_p, *, d_out, batch_tile=None,
                  d_h_tile=None):
    """x: [B, d_in]; padded params from prep_params(). Returns [B, d_out]."""
    B, d_in = x.shape
    d_h_p = w1_p.shape[1]
    d_out_p = w2_p.shape[1]
    out_dtype = x.dtype
    out_bytes = jnp.dtype(out_dtype).itemsize

    vmem_limit, default_tb = _tpu_budget()
    tb_cap = batch_tile if batch_tile is not None else default_tb

    # Batch tile: <= tb_cap, multiple of 8 sublanes (>=16 rows so the bf16
    # cast fills packed vreg tiles), balanced so the "parallel" batch axis
    # splits evenly across TensorCores. Ragged last tile handled by Pallas.
    if B <= tb_cap:
        tb = min(_round_up(max(B, 16), 8), _round_up(tb_cap, 8))
    else:
        n = _cdiv(B, tb_cap)
        tb = min(tb_cap, _round_up(_cdiv(B, n), 8))
    n_b = _cdiv(B, tb)

    cost = pl.CostEstimate(
        flops=int(2 * B * (d_in * d_h_p + d_h_p * d_out_p)),
        transcendentals=0,
        bytes_accessed=int(x.size * x.dtype.itemsize
                           + w1_p.size * w1_p.dtype.itemsize
                           + w2_p.size * w2_p.dtype.itemsize
                           + b1_p.size * b1_p.dtype.itemsize
                           + b2_p.size * b2_p.dtype.itemsize
                           + B * d_out_p * out_bytes))

    use_resident = (d_h_tile is None and
                    _resident_vmem_bytes(tb, d_in, d_h_p, d_out_p, out_bytes)
                    <= vmem_limit)

    if use_resident:
        # Weights/biases use constant index_maps -> DMA'd once and kept
        # VMEM-resident; x/out tiles are the only per-step DMA.
        out_p = pl.pallas_call(
            fcnet_resident_kernel,
            out_shape=jax.ShapeDtypeStruct((B, d_out_p), out_dtype),
            grid=(n_b,),
            in_specs=[
                pl.BlockSpec((tb, d_in), lambda i: (i, 0)),
                pl.BlockSpec((d_in, d_h_p), lambda i: (0, 0)),
                pl.BlockSpec((1, d_h_p), lambda i: (0, 0)),
                pl.BlockSpec((d_h_p, d_out_p), lambda i: (0, 0)),
                pl.BlockSpec((1, d_out_p), lambda i: (0, 0)),
            ],
            out_specs=pl.BlockSpec((tb, d_out_p), lambda i: (i, 0)),
            compiler_params=pltpu.CompilerParams(
                dimension_semantics=("parallel",),
                vmem_limit_bytes=vmem_limit),
            cost_estimate=cost,
        )(x, w1_p, b1_p, w2_p, b2_p)
    else:
        # Fallback for weights too large to keep resident: tile the hidden
        # dim as the last ("arbitrary") axis with an f32 accumulator scratch.
        if d_h_tile is not None and d_h_p % int(d_h_tile) == 0:
            tdh = int(d_h_tile)
        else:
            tdh = 128
            for cand in (2048, 1024, 512, 256):
                if (d_h_p % cand == 0 and
                        _dh_tiled_vmem_bytes(tb, d_in, cand, d_out_p, out_bytes)
                        <= vmem_limit):
                    tdh = cand
                    break
        n_dh = d_h_p // tdh
        out_p = pl.pallas_call(
            fcnet_dh_tiled_kernel,
            out_shape=jax.ShapeDtypeStruct((B, d_out_p), out_dtype),
            grid=(n_b, n_dh),
            in_specs=[
                pl.BlockSpec((tb, d_in), lambda i, j: (i, 0)),
                pl.BlockSpec((d_in, tdh), lambda i, j: (0, j)),
                pl.BlockSpec((1, tdh), lambda i, j: (0, j)),
                pl.BlockSpec((tdh, d_out_p), lambda i, j: (j, 0)),
                pl.BlockSpec((1, d_out_p), lambda i, j: (0, 0)),
            ],
            out_specs=pl.BlockSpec((tb, d_out_p), lambda i, j: (i, 0)),
            scratch_shapes=[pltpu.VMEM((tb, d_out_p), jnp.float32)],
            compiler_params=pltpu.CompilerParams(
                dimension_semantics=("parallel", "arbitrary"),
                vmem_limit_bytes=vmem_limit),
            cost_estimate=cost,
        )(x, w1_p, b1_p, w2_p, b2_p)

    return out_p[:, :d_out]


# ---------------------------------------------------------------------------
# Reference + demo
# ---------------------------------------------------------------------------
def fcnet_reference_bf16(x, w1, b1, w2, b2):
    """Reference following the kernel's precision path (bf16 ops, f32 accum)."""
    xb, w1b, w2b = (a.astype(jnp.bfloat16) for a in (x, w1, w2))
    h = jnp.dot(xb, w1b, preferred_element_type=jnp.float32)
    h = jnp.maximum(h + b1.reshape(1, -1).astype(jnp.float32), 0.0)
    y = jnp.dot(h.astype(jnp.bfloat16), w2b, preferred_element_type=jnp.float32)
    return y + b2.reshape(1, -1).astype(jnp.float32)


if __name__ == "__main__":
    key = jax.random.PRNGKey(0)
    k_x1, k_p1, k_x2, k_p2 = jax.random.split(key, 4)

    # --- Case 1: tiny shapes (single batch tile, resident weights) ----------
    B1, D_IN1, D_H1, D_OUT1 = 2, 32, 32, 16
    x1 = jax.random.normal(k_x1, (B1, D_IN1), jnp.float32)
    w1, b1, w2, b2 = init_params(k_p1, D_IN1, D_H1, D_OUT1)
    params1, d_out1 = prep_params(w1, b1, w2, b2)

    out1 = jax.block_until_ready(fcnet_forward(x1, *params1, d_out=d_out1))
    assert out1.shape == (B1, D_OUT1)
    ref1 = fcnet_reference_bf16(x1, w1, b1, w2, b2)
    assert jnp.allclose(out1, ref1, atol=1e-3, rtol=1e-3)
    ref1_f32 = jnp.maximum(x1 @ w1 + b1, 0.0) @ w2 + b2
    assert jnp.allclose(out1, ref1_f32, atol=5e-2, rtol=5e-2)

    # --- Case 2: batch-tiled path (ragged last tile, non-128 d_out) ---------
    B2, D_IN2, D_H2, D_OUT2 = 300, 64, 256, 96
    x2 = jax.random.normal(k_x2, (B2, D_IN2), jnp.float32)
    w1c, b1c, w2c, b2c = init_params(k_p2, D_IN2, D_H2, D_OUT2)
    params2, d_out2 = prep_params(w1c, b1c, w2c, b2c)
    ref2 = fcnet_reference_bf16(x2, w1c, b1c, w2c, b2c)

    out2 = jax.block_until_ready(
        fcnet_forward(x2, *params2, d_out=d_out2, batch_tile=128))
    assert out2.shape == (B2, D_OUT2)
    assert jnp.allclose(out2, ref2, atol=5e-3, rtol=5e-3)

    # --- Case 3: forced D_h-tiled (accumulator) fallback schedule -----------
    out3 = jax.block_until_ready(
        fcnet_forward(x2, *params2, d_out=d_out2, batch_tile=128, d_h_tile=128))
    assert out3.shape == (B2, D_OUT2)
    assert jnp.allclose(out3, ref2, atol=5e-3, rtol=5e-3)

    print("KERNEL_OK")
</pallas_src>

<mosaic_0001>
module attributes {stable_mosaic.version = 11 : i64} {
  func.func @fcnet_resident_kernel(%arg0: i32, %arg1: memref<16x32xf32, #tpu.memory_space<vmem>>, %arg2: memref<32x128xbf16, #tpu.memory_space<vmem>>, %arg3: memref<1x128xf32, #tpu.memory_space<vmem>>, %arg4: memref<128x128xbf16, #tpu.memory_space<vmem>>, %arg5: memref<1x128xf32, #tpu.memory_space<vmem>>, %arg6: memref<16x128xf32, #tpu.memory_space<vmem>>) attributes {dimension_semantics = [#tpu.dimension_semantics<parallel>], iteration_bounds = array<i64: 1>, scalar_prefetch = 0 : i64, scratch_operands = 0 : i64, tpu.core_type = #tpu.core_type<tc>, window_params = [{transform_indices = @transform_0, window_bounds = array<i64: 16, 32>}, {pipeline_mode = #tpu.pipeline_mode<synchronous>, transform_indices = @transform_1, window_bounds = array<i64: 32, 128>}, {pipeline_mode = #tpu.pipeline_mode<synchronous>, transform_indices = @transform_2, window_bounds = array<i64: 1, 128>}, {pipeline_mode = #tpu.pipeline_mode<synchronous>, transform_indices = @transform_3, window_bounds = array<i64: 128, 128>}, {pipeline_mode = #tpu.pipeline_mode<synchronous>, transform_indices = @transform_4, window_bounds = array<i64: 1, 128>}, {transform_indices = @transform_5, window_bounds = array<i64: 16, 128>}]} {
    %c0 = arith.constant 0 : index
    %c0_0 = arith.constant 0 : index
    %0 = vector.load %arg1[%c0, %c0_0] : memref<16x32xf32, #tpu.memory_space<vmem>>, vector<16x32xf32>
    %1 = arith.truncf %0 : vector<16x32xf32> to vector<16x32xbf16>
    %c0_1 = arith.constant 0 : index
    %c0_2 = arith.constant 0 : index
    %2 = vector.load %arg2[%c0_1, %c0_2] : memref<32x128xbf16, #tpu.memory_space<vmem>>, vector<32x128xbf16>
    %cst = arith.constant dense<0.000000e+00> : vector<16x128xf32>
    %3 = tpu.matmul %1, %2, %cst {dimension_numbers = #tpu.dot_dimension_numbers<[1], [0], [0], [1], [0, 0, 1, 1], [], []>} : vector<16x32xbf16>, vector<32x128xbf16>, vector<16x128xf32> -> vector<16x128xf32>
    %c0_3 = arith.constant 0 : index
    %c0_4 = arith.constant 0 : index
    %4 = vector.load %arg3[%c0_3, %c0_4] : memref<1x128xf32, #tpu.memory_space<vmem>>, vector<1x128xf32>
    %5 = vector.broadcast %4 : vector<1x128xf32> to vector<16x128xf32>
    %6 = arith.addf %3, %5 : vector<16x128xf32>
    %cst_5 = arith.constant 0.000000e+00 : f32
    %7 = vector.broadcast %cst_5 : f32 to vector<16x128xf32>
    %8 = arith.maximumf %6, %7 : vector<16x128xf32>
    %9 = arith.truncf %8 : vector<16x128xf32> to vector<16x128xbf16>
    %c0_6 = arith.constant 0 : index
    %c0_7 = arith.constant 0 : index
    %10 = vector.load %arg4[%c0_6, %c0_7] : memref<128x128xbf16, #tpu.memory_space<vmem>>, vector<128x128xbf16>
    %cst_8 = arith.constant dense<0.000000e+00> : vector<16x128xf32>
    %11 = tpu.matmul %9, %10, %cst_8 {dimension_numbers = #tpu.dot_dimension_numbers<[1], [0], [0], [1], [0, 0, 1, 1], [], []>} : vector<16x128xbf16>, vector<128x128xbf16>, vector<16x128xf32> -> vector<16x128xf32>
    %c0_9 = arith.constant 0 : index
    %c0_10 = arith.constant 0 : index
    %12 = vector.load %arg5[%c0_9, %c0_10] : memref<1x128xf32, #tpu.memory_space<vmem>>, vector<1x128xf32>
    %13 = vector.broadcast %12 : vector<1x128xf32> to vector<16x128xf32>
    %14 = arith.addf %11, %13 : vector<16x128xf32>
    %c0_11 = arith.constant 0 : index
    %c0_12 = arith.constant 0 : index
    %15 = vector.load %arg6[%c0_11, %c0_12] : memref<16x128xf32, #tpu.memory_space<vmem>>, vector<16x128xf32>
    tpu.vector_store %arg6[%c0_11, %c0_12], %14 {strides = array<i32>} : memref<16x128xf32, #tpu.memory_space<vmem>>, vector<16x128xf32>,
    return
  }
  func.func @transform_0(%arg0: i32) -> (i32, i32) {
    %c0_i32 = arith.constant 0 : i32
    %c0_i32_0 = arith.constant 0 : i32
    return %arg0, %c0_i32 : i32, i32
  }
  func.func @transform_1(%arg0: i32) -> (i32, i32) {
    %c0_i32 = arith.constant 0 : i32
    %c0_i32_0 = arith.constant 0 : i32
    %c0_i32_1 = arith.constant 0 : i32
    return %c0_i32, %c0_i32_0 : i32, i32
  }
  func.func @transform_2(%arg0: i32) -> (i32, i32) {
    %c0_i32 = arith.constant 0 : i32
    %c0_i32_0 = arith.constant 0 : i32
    %c0_i32_1 = arith.constant 0 : i32
    return %c0_i32, %c0_i32_0 : i32, i32
  }
  func.func @transform_3(%arg0: i32) -> (i32, i32) {
    %c0_i32 = arith.constant 0 : i32
    %c0_i32_0 = arith.constant 0 : i32
    %c0_i32_1 = arith.constant 0 : i32
    return %c0_i32, %c0_i32_0 : i32, i32
  }
  func.func @transform_4(%arg0: i32) -> (i32, i32) {
    %c0_i32 = arith.constant 0 : i32
    %c0_i32_0 = arith.constant 0 : i32
    %c0_i32_1 = arith.constant 0 : i32
    return %c0_i32, %c0_i32_0 : i32, i32
  }
  func.func @transform_5(%arg0: i32) -> (i32, i32) {
    %c0_i32 = arith.constant 0 : i32
    %c0_i32_0 = arith.constant 0 : i32
    return %arg0, %c0_i32 : i32, i32
  }
}

</mosaic_0001>

<llo_original>
// kernel: fcnet_forward.1
$region0: #{fcnet_forward.1}
  #allocation0 [shape = 'u32[]', space=smem, size = 0x4, offset = 0x4, fixed_abs, tag = 'smem constant byte address 0x4 - core index']
  #allocation1 [shape = 'u32[144,128]{1,0:T(1,128)}', space=vmem, size = 0x12000, scoped, tag = 'internal scratch']
  %s0 = inlined_call_operand.hbm [shape: f32[2,32], index: 0, kind: input, shape index: {}]
  %s1 = inlined_call_operand.hbm [shape: bf16[32,128], index: 1, kind: input, shape index: {}]
  %s2 = inlined_call_operand.vmem [shape: f32[1,128], index: 2, kind: input, shape index: {}]
  %s3 = inlined_call_operand.hbm [shape: bf16[128,128], index: 3, kind: input, shape index: {}]
  %s4 = inlined_call_operand.vmem [shape: f32[1,128], index: 4, kind: input, shape index: {}]
  %s5 = inlined_call_operand.hbm [shape: f32[2,128], index: 5, kind: output, shape index: {}]
  %s6 = sld [smem:[#allocation0]]
  $region42: #{fcnet_forward.1} parent=0
    _
  %s8 = ssub.s32 1, %s6
  %s9 = scalar_select 0, %s8, %s6
  $region1: #{fcnet_forward.1} parent=0
    #allocation2 [shape = 'u8[8192]{0}', space=vmem, size = 0x2000, scoped, tag = 'input window, operand 0, single buffered']
    #allocation3 [shape = 's32[1]{0}', space=sflag, size = 0x4, scoped, tag = 'scoped memory for fcnet_forward.1']
    #allocation4 [shape = 's32[1]{0}', space=sflag, size = 0x4, scoped, tag = 'scoped memory for fcnet_forward.1']
    #allocation5 [shape = 'u8[8192]{0}', space=vmem, size = 0x2000, scoped, tag = 'input window, operand 1, single buffered']
    #allocation6 [shape = 's32[1]{0}', space=sflag, size = 0x4, scoped, tag = 'scoped memory for fcnet_forward.1']
    #allocation7 [shape = 'u8[32768]{0}', space=vmem, size = 0x8000, scoped, tag = 'input window, operand 3, single buffered']
    #allocation8 [shape = 'u8[8192]{0}', space=vmem, size = 0x2000, scoped, tag = 'output window, operand 0, single buffered']
    %10 = vsyncpa [#allocation3], 0
    %11 = vsyncpa [#allocation6], 0
    %12 = vsyncpa [#allocation4], 0
    // Predicated region
    $region2: #{fcnet_forward.1} parent=1 // pred_check
      _
    $region3: #{fcnet_forward.1} parent=1 // pred_check_branch
      %14 = sbr.rel (0) target = $region5
    $region4: #{fcnet_forward.1} parent=1 // pred_region
      %s16 = ssub.s32 256, 32
      %17 = vsyncadd [#allocation3], %s16
      %s18 = sshll.u32 [#allocation2], 4
      %s19 = int_to_ptr.vmem [resolvable:$true] %s18
      %24 = dma.hbm_to_vmem [thread:$0]  %s0, 32, %s19, [#allocation3], 32, 32, 2
    $region5: #{fcnet_forward.1} parent=1 // pred_fallthru
      _
    // Predicated region
    $region6: #{fcnet_forward.1} parent=1 // pred_check
      _
    $region7: #{fcnet_forward.1} parent=1 // pred_check_branch
      %26 = sbr.rel (0) target = $region9
    $region8: #{fcnet_forward.1} parent=1 // pred_region
      %s28 = ssub.s32 256, 256
      %29 = vsyncadd [#allocation6], %s28
      %s30 = sshll.u32 [#allocation5], 4
      %s31 = int_to_ptr.vmem [resolvable:$true] %s30
      %36 = dma.hbm_to_vmem [thread:$0]  %s1, 256, %s31, [#allocation6], 64, 64, 4
    $region9: #{fcnet_forward.1} parent=1 // pred_fallthru
      _
    // Predicated region
    $region10: #{fcnet_forward.1} parent=1 // pred_check
      _
    $region11: #{fcnet_forward.1} parent=1 // pred_check_branch
      %38 = sbr.rel (0) target = $region13
    $region12: #{fcnet_forward.1} parent=1 // pred_region
      _
    $region13: #{fcnet_forward.1} parent=1 // pred_fallthru
      _
    // Predicated region
    $region14: #{fcnet_forward.1} parent=1 // pred_check
      _
    $region15: #{fcnet_forward.1} parent=1 // pred_check_branch
      %40 = sbr.rel (0) target = $region17
    $region16: #{fcnet_forward.1} parent=1 // pred_region
      %s42 = ssub.s32 1024, 1024
      %43 = vsyncadd [#allocation6], %s42
      %s44 = sshll.u32 [#allocation7], 4
      %s45 = int_to_ptr.vmem [resolvable:$true] %s44
      %50 = dma.hbm_to_vmem [thread:$0]  %s3, 1024, %s45, [#allocation6], 64, 64, 4
    $region17: #{fcnet_forward.1} parent=1 // pred_fallthru
      _
    // Predicated region
    $region18: #{fcnet_forward.1} parent=1 // pred_check
      _
    $region19: #{fcnet_forward.1} parent=1 // pred_check_branch
      %52 = sbr.rel (0) target = $region21
    $region20: #{fcnet_forward.1} parent=1 // pred_region
      _
    $region21: #{fcnet_forward.1} parent=1 // pred_fallthru
      _
    // Predicated region
    $region22: #{fcnet_forward.1} parent=1 // pred_check
      _
    $region23: #{fcnet_forward.1} parent=1 // pred_check_branch
      %54 = sbr.rel (0) target = $region25
    $region24: #{fcnet_forward.1} parent=1 // pred_region
      %55 = dma.done [#allocation3], 256
    $region25: #{fcnet_forward.1} parent=1 // pred_fallthru
      _
    // Predicated region
    $region26: #{fcnet_forward.1} parent=1 // pred_check
      _
    $region27: #{fcnet_forward.1} parent=1 // pred_check_branch
      %57 = sbr.rel (0) target = $region29
    $region28: #{fcnet_forward.1} parent=1 // pred_region
      %58 = dma.done [#allocation6], 256
    $region29: #{fcnet_forward.1} parent=1 // pred_fallthru
      _
    // Predicated region
    $region30: #{fcnet_forward.1} parent=1 // pred_check
      _
    $region31: #{fcnet_forward.1} parent=1 // pred_check_branch
      %60 = sbr.rel (0) target = $region33
    $region32: #{fcnet_forward.1} parent=1 // pred_region
      %61 = dma.done [#allocation6], 1024
    $region33: #{fcnet_forward.1} parent=1 // pred_fallthru
      _
    %v63 = vld [vmem:[#allocation2] sm:$0xff]
    %v64 = vld [vmem:[#allocation2 + $0x8] sm:$0xff]
    %v65 = vpack.c.bf16 %v64, %v63
    %v66 = vld [vmem:[#allocation5] sm:$0xf]
    %v67 = vld [vmem:[#allocation5 + $0x4] sm:$0xf]
    %v68 = vld [vmem:[#allocation5 + $0x8] sm:$0xf]
    %v69 = vld [vmem:[#allocation5 + $0xc] sm:$0xf]
    %v70 = vld [vmem:[%s2] sm:$0x1]
    %v72 = vlaneseq
    %v73 = vshrl.u32 %v72, 7
    %v74 = vsub.s32 0, %v73
    %v75 = vrot.slane %v70, %v74
    %v81 = vunpack.c.l.b16 %v66
    %v82 = vunpack.c.l.b16 %v67
    %v83 = vunpack.c.l.b16 %v68
    %v84 = vunpack.c.l.b16 %v69
    %v85 = vpack.c.b16 %v82, %v81
    %v86 = vpack.c.b16 %v84, %v83
    %vm89 = vcmask 261120
    %v91 = vsel %vm89, %v65, 0
    %93 = vmatprep.subr.bf16.mxu0 0
    %94 = vmatpush1.bf16.msra.mxu0 0
    %95 = vmatprep.subr.bf16.mxu0 0
    %96 = vmatpush1.bf16.msra.mxu0 0
    %97 = vmatprep.subr.bf16.mxu0 0
    %98 = vmatpush1.bf16.msra.mxu0 0
    %99 = vmatprep.subr.bf16.mxu0 0
    %100 = vmatpush1.bf16.msra.mxu0 0
    %101 = vmatprep.subr.bf16.mxu0 0
    %102 = vmatpush1.bf16.msra.mxu0 0
    %103 = vmatprep.subr.bf16.mxu0 0
    %104 = vmatpush1.bf16.msra.mxu0 0
    %105 = vmatprep.subr.bf16.mxu0 0
    %106 = vmatpush1.bf16.msra.mxu0 %v86
    %107 = vmatprep.subr.bf16.mxu0 0
    %108 = vmatpush1.bf16.msra.mxu0 %v85
    %109 = vmatprep.subr.bf16.mxu0 0
    %110 = vmatpush2.bf16.msra.mxu0 0
    %111 = vmatprep.subr.bf16.mxu0 0
    %112 = vmatpush2.bf16.msra.mxu0 0
    %113 = vmatprep.subr.bf16.mxu0 0
    %114 = vmatpush2.bf16.msra.mxu0 0
    %115 = vmatprep.subr.bf16.mxu0 0
    %116 = vmatpush2.bf16.msra.mxu0 0
    %117 = vmatprep.subr.bf16.mxu0 0
    %118 = vmatpush2.bf16.msra.mxu0 0
    %119 = vmatprep.subr.bf16.mxu0 0
    %120 = vmatpush2.bf16.msra.mxu0 0
    %121 = vmatprep.subr.bf16.mxu0 0
    %122 = vmatpush2.bf16.msra.mxu0 0
    %123 = vmatprep.subr.bf16.mxu0 0
    %124 = vmatpush2.bf16.msra.mxu0 0
    %125 = vmatprep.mubr.bf16.mxu0 0
    %126 = vmatmul.mubr.bf16.gmra.mxu0 %v91
    %v127 = vpop.f32.mrf.mxu0
    %v128 = vadd.f32 %v75, %v127
    %v129 = vpop.f32.mrf.mxu0
    %v130 = vpop.f32.mrf.mxu0
    %v131 = vadd.f32 %v75, %v130
    %v132 = vpop.f32.mrf.mxu0
    %133 = vdwg.mxu0
    %v134 = vmax.f32 %v128, 0.0
    %v135 = vmax.f32 %v131, 0.0
    %v136 = vpack.c.bf16 %v135, %v134
    %v137 = vld [vmem:[#allocation7] sm:$0xf]
    %v138 = vld [vmem:[#allocation7 + $0x4] sm:$0xf]
    %v139 = vld [vmem:[#allocation7 + $0x8] sm:$0xf]
    %v140 = vld [vmem:[#allocation7 + $0xc] sm:$0xf]
    %v141 = vld [vmem:[#allocation7 + $0x10] sm:$0xf]
    %v142 = vld [vmem:[#allocation7 + $0x14] sm:$0xf]
    %v143 = vld [vmem:[#allocation7 + $0x18] sm:$0xf]
    %v144 = vld [vmem:[#allocation7 + $0x1c] sm:$0xf]
    %v145 = vld [vmem:[#allocation7 + $0x20] sm:$0xf]
    %v146 = vld [vmem:[#allocation7 + $0x24] sm:$0xf]
    %v147 = vld [vmem:[#allocation7 + $0x28] sm:$0xf]
    %v148 = vld [vmem:[#allocation7 + $0x2c] sm:$0xf]
    %v149 = vld [vmem:[#allocation7 + $0x30] sm:$0xf]
    %v150 = vld [vmem:[#allocation7 + $0x34] sm:$0xf]
    %v151 = vld [vmem:[#allocation7 + $0x38] sm:$0xf]
    %v152 = vld [vmem:[#allocation7 + $0x3c] sm:$0xf]
    %v153 = vld [vmem:[%s4] sm:$0x1]
    %v155 = vlaneseq
    %v156 = vshrl.u32 %v155, 7
    %v157 = vsub.s32 0, %v156
    %v158 = vrot.slane %v153, %v157
    %v176 = vunpack.c.l.b16 %v137
    %v177 = vunpack.c.l.b16 %v138
    %v178 = vunpack.c.l.b16 %v139
    %v179 = vunpack.c.l.b16 %v140
    %v180 = vunpack.c.l.b16 %v141
    %v181 = vunpack.c.l.b16 %v142
    %v182 = vunpack.c.l.b16 %v143
    %v183 = vunpack.c.l.b16 %v144
    %v184 = vunpack.c.l.b16 %v145
    %v185 = vunpack.c.l.b16 %v146
    %v186 = vunpack.c.l.b16 %v147
    %v187 = vunpack.c.l.b16 %v148
    %v188 = vunpack.c.l.b16 %v149
    %v189 = vunpack.c.l.b16 %v150
    %v190 = vunpack.c.l.b16 %v151
    %v191 = vunpack.c.l.b16 %v152
    %v192 = vpack.c.b16 %v177, %v176
    %v193 = vpack.c.b16 %v179, %v178
    %v194 = vpack.c.b16 %v181, %v180
    %v195 = vpack.c.b16 %v183, %v182
    %v196 = vpack.c.b16 %v185, %v184
    %v197 = vpack.c.b16 %v187, %v186
    %v198 = vpack.c.b16 %v189, %v188
    %v199 = vpack.c.b16 %v191, %v190
    %208 = vmatprep.subr.bf16.mxu0 0
    %209 = vmatpush1.bf16.msra.mxu0 %v199
    %210 = vmatprep.subr.bf16.mxu0 0
    %211 = vmatpush1.bf16.msra.mxu0 %v198
    %212 = vmatprep.subr.bf16.mxu0 0
    %213 = vmatpush1.bf16.msra.mxu0 %v197
    %214 = vmatprep.subr.bf16.mxu0 0
    %215 = vmatpush1.bf16.msra.mxu0 %v196
    %216 = vmatprep.subr.bf16.mxu0 0
    %217 = vmatpush1.bf16.msra.mxu0 %v195
    %218 = vmatprep.subr.bf16.mxu0 0
    %219 = vmatpush1.bf16.msra.mxu0 %v194
    %220 = vmatprep.subr.bf16.mxu0 0
    %221 = vmatpush1.bf16.msra.mxu0 %v193
    %222 = vmatprep.subr.bf16.mxu0 0
    %223 = vmatpush1.bf16.msra.mxu0 %v192
    %224 = vmatprep.subr.bf16.mxu0 0
    %225 = vmatpush2.bf16.msra.mxu0 0
    %226 = vmatprep.subr.bf16.mxu0 0
    %227 = vmatpush2.bf16.msra.mxu0 0
    %228 = vmatprep.subr.bf16.mxu0 0
    %229 = vmatpush2.bf16.msra.mxu0 0
    %230 = vmatprep.subr.bf16.mxu0 0
    %231 = vmatpush2.bf16.msra.mxu0 0
    %232 = vmatprep.subr.bf16.mxu0 0
    %233 = vmatpush2.bf16.msra.mxu0 0
    %234 = vmatprep.subr.bf16.mxu0 0
    %235 = vmatpush2.bf16.msra.mxu0 0
    %236 = vmatprep.subr.bf16.mxu0 0
    %237 = vmatpush2.bf16.msra.mxu0 0
    %238 = vmatprep.subr.bf16.mxu0 0
    %239 = vmatpush2.bf16.msra.mxu0 0
    %240 = vmatprep.mubr.bf16.mxu0 0
    %241 = vmatmul.mubr.bf16.gmra.mxu0 %v136
    %v242 = vpop.f32.mrf.mxu0
    %v243 = vadd.f32 %v158, %v242
    %v244 = vpop.f32.mrf.mxu0
    %v245 = vpop.f32.mrf.mxu0
    %v246 = vadd.f32 %v158, %v245
    %v247 = vpop.f32.mrf.mxu0
    %248 = vdwg.mxu0
    %249 = vst [vmem:[#allocation8] sm:$0xff] %v243
    %250 = vst [vmem:[#allocation8 + $0x8] sm:$0xff] %v246
    // Predicated region
    $region34: #{fcnet_forward.1} parent=1 // pred_check
      _
    $region35: #{fcnet_forward.1} parent=1 // pred_check_branch
      %252 = sbr.rel (0) target = $region37
    $region36: #{fcnet_forward.1} parent=1 // pred_region
      %s254 = ssub.s32 256, 32
      %255 = vsyncadd [#allocation4], %s254
      %s256 = sshll.u32 [#allocation8], 4
      %s257 = int_to_ptr.vmem [resolvable:$true] %s256
      %262 = dma.vmem_to_hbm [thread:$0]  %s257, 32, %s5, [#allocation4], 32, 32, 2
    $region37: #{fcnet_forward.1} parent=1 // pred_fallthru
      _
    // Predicated region
    $region38: #{fcnet_forward.1} parent=1 // pred_check
      _
    $region39: #{fcnet_forward.1} parent=1 // pred_check_branch
      %264 = sbr.rel (0) target = $region41
    $region40: #{fcnet_forward.1} parent=1 // pred_region
      %265 = dma.done [#allocation4], 256
    $region41: #{fcnet_forward.1} parent=1 // pred_fallthru
      _
    %266 = vsyncpa [#allocation3], 1
    %267 = vsyncpa [#allocation6], 1
    %268 = vsyncpa [#allocation4], 1

</llo_original>
